<compile_context>
chip_gen: v6e
topology: v6e:2x2x1
jax: 0.10.0
libtpu: 0.0.40
codegen_flags: <defaults>
</compile_context>

<pallas_src>
import functools
import math

import jax
import jax.numpy as jnp
from jax.experimental import pallas as pl
from jax.experimental.pallas import tpu as pltpu

_LANES = 128
_LOG_2PI = math.log(2.0 * math.pi)


def _gaussian_nll_kernel(x_ref, out_ref, acc_ref, *, eps, n_valid):
    """x_ref: [3, tile_r, 128] (mean, var, y_true), out_ref: [1,1] SMEM,
    acc_ref: [tile_r, 128] f32 VMEM running accumulator."""
    t = pl.program_id(0)

    @pl.when(t == 0)
    def _init():
        acc_ref[...] = jnp.zeros_like(acc_ref)

    mean = x_ref[0]                             # [tile_r, 128]
    var = jnp.maximum(x_ref[1], eps)            # clamp(min=eps)
    yt = x_ref[2]
    diff = yt - mean
    inv_var = pl.reciprocal(var, approx=False)  # exact 1/var, multiply not divide
    # accumulate sum(log(var) + diff^2 / var); 0.5, log(2*pi), 1/N applied once
    acc_ref[...] += jnp.log(var) + diff * diff * inv_var

    @pl.when(t == pl.num_programs(0) - 1)
    def _finalize():
        total = jnp.sum(acc_ref[...])           # single XLU reduction
        out_ref[0, 0] = 0.5 * (total * (1.0 / n_valid) + _LOG_2PI)


def gaussian_nll_loss(y_pred, y_true, eps=1e-6, max_tile_rows=2048):
    """y_pred: [B, 2] float, y_true: [B] float -> scalar float32."""
    assert y_pred.ndim == 2 and y_pred.shape[1] == 2
    assert y_true.shape == (y_pred.shape[0],)
    assert max_tile_rows % 8 == 0

    b = y_pred.shape[0]
    mean = y_pred[:, 0].astype(jnp.float32)
    var = y_pred[:, 1].astype(jnp.float32)
    yt = y_true.astype(jnp.float32)

    # Pack batch into a sublane/lane-dense [r, 128] layout.
    r = ((pl.cdiv(b, _LANES) + 7) // 8) * 8      # rows, multiple of 8
    tile_r = min(r, max_tile_rows)
    r = ((r + tile_r - 1) // tile_r) * tile_r    # rows divisible by tile_r
    padded = r * _LANES
    pad = padded - b

    if pad:
        # Padding (mean=0, var=1, y=0) contributes log(1) + 0 = 0 to the sum.
        mean = jnp.concatenate([mean, jnp.zeros((pad,), jnp.float32)])
        var = jnp.concatenate([var, jnp.ones((pad,), jnp.float32)])
        yt = jnp.concatenate([yt, jnp.zeros((pad,), jnp.float32)])

    # Single channel-major slab -> one lane-dense DMA stream per grid step.
    slab = jnp.stack([mean, var, yt], axis=0).reshape(3, r, _LANES)
    num_tiles = r // tile_r

    kernel = functools.partial(_gaussian_nll_kernel,
                               eps=float(eps), n_valid=float(b))

    out = pl.pallas_call(
        kernel,
        out_shape=jax.ShapeDtypeStruct((1, 1), jnp.float32),
        grid_spec=pltpu.PrefetchScalarGridSpec(
            num_scalar_prefetch=0,
            grid=(num_tiles,),
            in_specs=[
                pl.BlockSpec((3, tile_r, _LANES), lambda t: (0, t, 0)),
            ],
            out_specs=pl.BlockSpec(memory_space=pltpu.SMEM),
            scratch_shapes=[pltpu.VMEM((tile_r, _LANES), jnp.float32)],
        ),
        compiler_params=pltpu.CompilerParams(
            dimension_semantics=("arbitrary",)),
    )(slab)
    return out[0, 0]


def _reference(y_pred, y_true, eps=1e-6):
    mean = y_pred[:, 0]
    var = jnp.maximum(y_pred[:, 1], eps)
    nll = 0.5 * (jnp.log(2.0 * math.pi * var) + (y_true - mean) ** 2 / var)
    return jnp.mean(nll)


if __name__ == "__main__":
    key = jax.random.PRNGKey(0)
    k1, k2, k3, k4 = jax.random.split(key, 4)

    # Case 1: small batch, not a multiple of 128 (exercises padding path,
    # single-tile grid).
    B1 = 300
    y_pred1 = jax.random.normal(k1, (B1, 2), dtype=jnp.float32)
    y_pred1 = y_pred1.at[:, 1].set(jnp.abs(y_pred1[:, 1]) + 0.1)
    y_true1 = jax.random.normal(k2, (B1,), dtype=jnp.float32)
    loss1 = gaussian_nll_loss(y_pred1, y_true1)
    jax.block_until_ready(loss1)
    ref1 = _reference(y_pred1, y_true1)
    assert jnp.allclose(loss1, ref1, atol=1e-5, rtol=1e-5), (loss1, ref1)

    # Case 2: batch with an artificially small tile cap to exercise the
    # multi-step pipelined grid + running vector accumulator (grid = 4).
    B2 = 4096
    y_pred2 = jax.random.normal(k3, (B2, 2), dtype=jnp.float32)
    y_pred2 = y_pred2.at[:, 1].set(jnp.abs(y_pred2[:, 1]) + 0.1)
    y_true2 = jax.random.normal(k4, (B2,), dtype=jnp.float32)
    loss2 = gaussian_nll_loss(y_pred2, y_true2, max_tile_rows=8)
    jax.block_until_ready(loss2)
    ref2 = _reference(y_pred2, y_true2)
    assert jnp.allclose(loss2, ref2, atol=1e-5, rtol=1e-5), (loss2, ref2)

    print("KERNEL_OK")
</pallas_src>

<mosaic_0001>
module attributes {stable_mosaic.version = 11 : i64} {
  func.func @_gaussian_nll_kernel(%arg0: i32, %arg1: memref<3x8x128xf32, #tpu.memory_space<vmem>>, %arg2: memref<1x1xf32, #tpu.memory_space<smem>>, %arg3: memref<8x128xf32, #tpu.memory_space<vmem>>) attributes {dimension_semantics = [#tpu.dimension_semantics<arbitrary>], iteration_bounds = array<i64: 1>, scalar_prefetch = 0 : i64, scratch_operands = 1 : i64, tpu.core_type = #tpu.core_type<tc>, window_params = [{transform_indices = @transform_0, window_bounds = array<i64: 3, 8, 128>}, {transform_indices = @transform_1, window_bounds = array<i64: 1, 1>}]} {
    %c0_i32 = arith.constant 0 : i32
    %0 = arith.cmpi eq, %arg0, %c0_i32 : i32
    %1 = arith.extui %0 : i1 to i32
    %c0_i32_0 = arith.constant 0 : i32
    %2 = arith.cmpi ne, %1, %c0_i32_0 : i32
    scf.if %2 {
      %cst_13 = arith.constant 0.000000e+00 : f32
      %23 = vector.broadcast %cst_13 : f32 to vector<8x128xf32>
      %c0_14 = arith.constant 0 : index
      %c0_15 = arith.constant 0 : index
      %24 = vector.load %arg3[%c0_14, %c0_15] : memref<8x128xf32, #tpu.memory_space<vmem>>, vector<8x128xf32>
      tpu.vector_store %arg3[%c0_14, %c0_15], %23 {strides = array<i32>} : memref<8x128xf32, #tpu.memory_space<vmem>>, vector<8x128xf32>,
    } else {
    }
    %c0 = arith.constant 0 : index
    %c0_1 = arith.constant 0 : index
    %c0_2 = arith.constant 0 : index
    %3 = vector.load %arg1[%c0, %c0_1, %c0_2] : memref<3x8x128xf32, #tpu.memory_space<vmem>>, vector<1x8x128xf32>
    %4 = vector.shape_cast %3 : vector<1x8x128xf32> to vector<8x128xf32>
    %c1 = arith.constant 1 : index
    %c0_3 = arith.constant 0 : index
    %c0_4 = arith.constant 0 : index
    %5 = vector.load %arg1[%c1, %c0_3, %c0_4] : memref<3x8x128xf32, #tpu.memory_space<vmem>>, vector<1x8x128xf32>
    %6 = vector.shape_cast %5 : vector<1x8x128xf32> to vector<8x128xf32>
    %cst = arith.constant 9.99999997E-7 : f32
    %7 = vector.broadcast %cst : f32 to vector<8x128xf32>
    %8 = arith.maximumf %6, %7 : vector<8x128xf32>
    %c2 = arith.constant 2 : index
    %c0_5 = arith.constant 0 : index
    %c0_6 = arith.constant 0 : index
    %9 = vector.load %arg1[%c2, %c0_5, %c0_6] : memref<3x8x128xf32, #tpu.memory_space<vmem>>, vector<1x8x128xf32>
    %10 = vector.shape_cast %9 : vector<1x8x128xf32> to vector<8x128xf32>
    %11 = arith.subf %10, %4 : vector<8x128xf32>
    %12 = tpu.reciprocal %8 : vector<8x128xf32> -> vector<8x128xf32>
    %c0_7 = arith.constant 0 : index
    %c0_8 = arith.constant 0 : index
    %13 = vector.load %arg3[%c0_7, %c0_8] : memref<8x128xf32, #tpu.memory_space<vmem>>, vector<8x128xf32>
    %14 = math.log %8 : vector<8x128xf32>
    %15 = arith.mulf %11, %11 : vector<8x128xf32>
    %16 = arith.mulf %15, %12 : vector<8x128xf32>
    %17 = arith.addf %14, %16 : vector<8x128xf32>
    %18 = arith.addf %13, %17 : vector<8x128xf32>
    %c0_9 = arith.constant 0 : index
    %c0_10 = arith.constant 0 : index
    %19 = vector.load %arg3[%c0_9, %c0_10] : memref<8x128xf32, #tpu.memory_space<vmem>>, vector<8x128xf32>
    tpu.vector_store %arg3[%c0_9, %c0_10], %18 {strides = array<i32>} : memref<8x128xf32, #tpu.memory_space<vmem>>, vector<8x128xf32>,
    %c0_i32_11 = arith.constant 0 : i32
    %20 = arith.cmpi eq, %arg0, %c0_i32_11 : i32
    %21 = arith.extui %20 : i1 to i32
    %c0_i32_12 = arith.constant 0 : i32
    %22 = arith.cmpi ne, %21, %c0_i32_12 : i32
    scf.if %22 {
      %c0_13 = arith.constant 0 : index
      %c0_14 = arith.constant 0 : index
      %23 = vector.load %arg3[%c0_13, %c0_14] : memref<8x128xf32, #tpu.memory_space<vmem>>, vector<8x128xf32>
      %24 = vector.shape_cast %23 : vector<8x128xf32> to vector<1x8x128xf32>
      %cst_15 = arith.constant dense<0.000000e+00> : vector<1xf32>
      %25 = vector.multi_reduction <add>, %24, %cst_15 [1, 2] : vector<1x8x128xf32> to vector<1xf32>
      %26 = vector.shape_cast %25 : vector<1xf32> to vector<1x1x1xf32>
      %27 = vector.extract %26[0, 0, 0] : f32 from vector<1x1x1xf32>
      %cst_16 = arith.constant 0.00333333341 : f32
      %28 = arith.mulf %27, %cst_16 : f32
      %cst_17 = arith.constant 1.83787704 : f32
      %29 = arith.addf %28, %cst_17 : f32
      %cst_18 = arith.constant 5.000000e-01 : f32
      %30 = arith.mulf %cst_18, %29 : f32
      %c0_19 = arith.constant 0 : index
      %c0_20 = arith.constant 0 : index
      %31 = memref.load %arg2[%c0_19, %c0_20] : memref<1x1xf32, #tpu.memory_space<smem>>
      memref.store %30, %arg2[%c0_19, %c0_20] : memref<1x1xf32, #tpu.memory_space<smem>>
    } else {
    }
    return
  }
  func.func @transform_0(%arg0: i32) -> (i32, i32, i32) {
    %c0_i32 = arith.constant 0 : i32
    %c0_i32_0 = arith.constant 0 : i32
    %c0_i32_1 = arith.constant 0 : i32
    return %c0_i32, %arg0, %c0_i32_0 : i32, i32, i32
  }
  func.func @transform_1(%arg0: i32) -> (i32, i32) {
    %c0_i32 = arith.constant 0 : i32
    %c0_i32_0 = arith.constant 0 : i32
    %c0_i32_1 = arith.constant 0 : i32
    return %c0_i32, %c0_i32_0 : i32, i32
  }
}

</mosaic_0001>

<llo_original>
// kernel: tpu_custom_call.1
$region0: #{tpu_custom_call.1}
  #allocation0 [shape = 'u32[]', space=smem, size = 0x4, offset = 0x4, fixed_abs, tag = 'smem constant byte address 0x4 - core index']
  #allocation1 [shape = 'u32[144,128]{1,0:T(1,128)}', space=vmem, size = 0x12000, scoped, tag = 'internal scratch']
  #allocation2 [shape = 'f32[8,128]{1,0:T(8,128)}', space=vmem, size = 0x1000, scoped, tag = 'scratch operand']
  %s0 = inlined_call_operand.hbm [shape: f32[3,8,128], index: 0, kind: input, shape index: {}]
  %s1 = inlined_call_operand.hbm [shape: f32[1,1], index: 1, kind: output, shape index: {}]
  %s2 = sld [smem:[#allocation0]]
  $region26: #{tpu_custom_call.1} parent=0
    _
  %s4 = ssub.s32 1, %s2
  %s5 = scalar_select 0, %s4, %s2
  $region1: #{tpu_custom_call.1} parent=0
    #allocation3 [shape = 'u8[12288]{0}', space=vmem, size = 0x3000, scoped, tag = 'input window, operand 0, single buffered']
    #allocation4 [shape = 's32[1]{0}', space=sflag, size = 0x4, scoped, tag = 'scoped memory for tpu_custom_call.1']
    #allocation5 [shape = 's32[1]{0}', space=sflag, size = 0x4, scoped, tag = 'scoped memory for tpu_custom_call.1']
    #allocation6 [shape = 'u8[512]{0}', space=smem, size = 0x200, scoped, tag = 'output window, operand 0, single buffered']
    %6 = vsyncpa [#allocation4], 0
    %7 = vsyncpa [#allocation5], 0
    // Predicated region
    $region2: #{tpu_custom_call.1} parent=1 // pred_check
      _
    $region3: #{tpu_custom_call.1} parent=1 // pred_check_branch
      %9 = sbr.rel (0) target = $region5
    $region4: #{tpu_custom_call.1} parent=1 // pred_region
      %s11 = ssub.s32 384, 384
      %12 = vsyncadd [#allocation4], %s11
      %s13 = sshll.u32 [#allocation3], 4
      %s14 = int_to_ptr.vmem [resolvable:$true] %s13
      %19 = dma.hbm_to_vmem [thread:$0]  %s0, 384, %s14, [#allocation4], 128, 128, 8
    $region5: #{tpu_custom_call.1} parent=1 // pred_fallthru
      _
    // Predicated region
    $region6: #{tpu_custom_call.1} parent=1 // pred_check
      _
    $region7: #{tpu_custom_call.1} parent=1 // pred_check_branch
      %21 = sbr.rel (0) target = $region9
    $region8: #{tpu_custom_call.1} parent=1 // pred_region
      %22 = dma.done [#allocation4], 384
    $region9: #{tpu_custom_call.1} parent=1 // pred_fallthru
      _
    %p23 = scmp.eq.s32.totalorder 0, 0
    // Predicated region
    $region10: #{tpu_custom_call.1} parent=1 // pred_check
      %p24 = pneg %p23
    $region11: #{tpu_custom_call.1} parent=1 // pred_check_branch
      %26 = sbr.rel (%p24) target = $region13
    $region12: #{tpu_custom_call.1} parent=1 // pred_region
      %27 = vst [vmem:[#allocation2] sm:$0xff] 0.0
    $region13: #{tpu_custom_call.1} parent=1 // pred_fallthru
      _
    %v28 = vld [vmem:[#allocation3] sm:$0xff]
    %s29 = scalar_lea.vmem [#allocation3], 8
    %v30 = vld [vmem:[%s29] sm:$0xff]
    %v31 = vmax.f32 %v30, 1e-06
    %s32 = scalar_lea.vmem [#allocation3], 16
    %v33 = vld [vmem:[%s32] sm:$0xff]
    %v34 = vsub.f32 %v33, %v28
    %v35 = vrcp.pop %v31
    %v36 = vld [vmem:[#allocation2] sm:$0xff]
    %v37 = vlog2.pop %v31
    %v38 = vmul.f32 %v37, 0.6931472
    %v39 = vmul.f32 %v34, %v34
    %v40 = vmul.f32 %v39, %v35
    %v41 = vadd.f32 %v38, %v40
    %v42 = vadd.f32 %v36, %v41
    %43 = vst [vmem:[#allocation2] sm:$0xff] %v42
    // Predicated region
    $region14: #{tpu_custom_call.1} parent=1 // pred_check
      %p44 = pneg %p23
    $region15: #{tpu_custom_call.1} parent=1 // pred_check_branch
      %46 = sbr.rel (%p44) target = $region17
    $region16: #{tpu_custom_call.1} parent=1 // pred_region
      %v47 = vld [vmem:[#allocation2] sm:$0xff]
      %48 = vadd.xlane.f32.xlu0 %v47
      %v49 = vpop.xlane.xlu0 %48
      %v50 = vrot.slane %v49, 4
      %v51 = vadd.f32 %v49, %v50
      %v52 = vrot.slane %v51, 2
      %v53 = vadd.f32 %v51, %v52
      %v54 = vrot.slane %v53, 1
      %v55 = vadd.f32 %v53, %v54
      %s56 = vtos %v55
      %s57 = smul.f32 %s56, 0.0033333334
      %s58 = sadd.f32 %s57, 1.837877
      %s59 = smul.f32 %s58, 0.5
      %s60 = scalar_lea.smem [#allocation6], 0
      %61 = sst [smem:[%s60]] %s59
    $region17: #{tpu_custom_call.1} parent=1 // pred_fallthru
      _
    // Predicated region
    $region18: #{tpu_custom_call.1} parent=1 // pred_check
      _
    $region19: #{tpu_custom_call.1} parent=1 // pred_check_branch
      %63 = sbr.rel (0) target = $region21
    $region20: #{tpu_custom_call.1} parent=1 // pred_region
      %s65 = ssub.s32 16, 16
      %66 = vsyncadd [#allocation5], %s65
      %69 = dma.smem_to_hbm [#allocation6], 16, %s1, [#allocation5]
    $region21: #{tpu_custom_call.1} parent=1 // pred_fallthru
      _
    // Predicated region
    $region22: #{tpu_custom_call.1} parent=1 // pred_check
      _
    $region23: #{tpu_custom_call.1} parent=1 // pred_check_branch
      %71 = sbr.rel (0) target = $region25
    $region24: #{tpu_custom_call.1} parent=1 // pred_region
      %72 = dma.done [#allocation5], 16
    $region25: #{tpu_custom_call.1} parent=1 // pred_fallthru
      _
    %73 = sfence
    %74 = vsyncpa [#allocation4], 1
    %75 = vsyncpa [#allocation5], 1

</llo_original>
